<compile_context>
chip_gen: v7x
topology: tpu7x:2x2x1
jax: 0.10.0
libtpu: 0.0.40
codegen_flags: <defaults>
</compile_context>

<pallas_src>
import math

import numpy as np
import jax
import jax.numpy as jnp
from jax.experimental import pallas as pl
from jax.experimental.pallas import tpu as pltpu


# ----------------------------- small host-side helpers -----------------------------

def adaptive_kernel_size(channels: int) -> int:
    k = math.ceil((math.log2(channels) + 1) / 2)
    return k if k % 2 == 1 else k + 1


def _round_up(x: int, m: int) -> int:
    return (x + m - 1) // m * m


def _vmem_capacity_bytes() -> int:
    try:
        return int(pltpu.get_tpu_info().vmem_capacity_bytes)
    except Exception:
        return 64 * 1024 * 1024          # conservative fallback (v7x per-core VMEM)


def _is_v7() -> bool:
    try:
        kind = jax.devices()[0].device_kind.lower().replace(" ", "")
        return ("v7" in kind) or ("tpu7" in kind)
    except Exception:
        return False


_BUFFERED_OK = None


def _buffered_supported() -> bool:
    """Probe pl.Buffered(1) (single-buffered constant operands) exactly once."""
    global _BUFFERED_OK
    if _BUFFERED_OK is None:
        if not hasattr(pl, "Buffered"):
            _BUFFERED_OK = False
            return _BUFFERED_OK
        try:
            def _copy(x_ref, o_ref):
                o_ref[...] = x_ref[...]

            fn = pl.pallas_call(
                _copy,
                out_shape=jax.ShapeDtypeStruct((8, 128), jnp.float32),
                grid=(1,),
                in_specs=[pl.BlockSpec((8, 128), lambda i: (0, 0),
                                       pipeline_mode=pl.Buffered(1))],
                out_specs=pl.BlockSpec((8, 128), lambda i: (0, 0)),
            )
            jax.block_until_ready(fn(jnp.zeros((8, 128), jnp.float32)))
            _BUFFERED_OK = True
        except Exception:
            _BUFFERED_OK = False
    return _BUFFERED_OK


# ------------------------------- shape / VMEM planning ------------------------------

def _plan(B, C, H, W, K, buffered_ok):
    HW = H * W
    P = K // 2

    cap = _vmem_capacity_bytes()
    if cap >= (96 << 20):                # v5e / v6e: 128 MiB physical -> raise scoped limit
        vmem_limit = 100 << 20
    else:                                # v7x: 64 MiB per core -> stay well below
        vmem_limit = cap - (8 << 20)
    vmem_limit = max(32 << 20, min(vmem_limit, 100 << 20))
    usable = vmem_limit - (6 << 20)      # headroom for Mosaic-internal scratch

    # --- spatial Toeplitz striping: keep the per-step weight slice inside a budget ---
    weight_budget = max(4 << 20, int(0.35 * usable))

    def band_bytes(Hs, nbuf):
        win_h = min(H, Hs + 2 * P)
        return nbuf * (2 * win_h * W) * (Hs * W) * 2          # bf16

    dense_nbuf = 1 if buffered_ok else 2
    Hs = H
    if band_bytes(H, dense_nbuf) > weight_budget:
        stripe_cands = [d for d in range(H - 1, 0, -1)
                        if H % d == 0 and (d * W) % 128 == 0]
        fitting = [d for d in stripe_cands if band_bytes(d, 2) <= weight_budget]
        if fitting:
            Hs = fitting[0]              # largest lane-aligned stripe that fits
        elif stripe_cands:
            Hs = stripe_cands[-1]        # best effort
        # TODO(synk): if no lane-aligned stripe exists, pad W host-side to 128 first.
    n_stripes = H // Hs
    win_h = min(H, Hs + 2 * P)
    HsW = Hs * W
    w_bytes = band_bytes(Hs, dense_nbuf if n_stripes == 1 else 2)

    # --- batch block: largest Bblk whose activation blocks fit the remaining VMEM ---
    def act_bytes(Bblk):
        sb = _round_up(Bblk, 8)
        x_in = 2 * C * sb * _round_up(HW, 128) * 4            # double-buffered input
        y_out = 2 * C * sb * _round_up(HsW, 128) * 4          # double-buffered output
        s_sc = sb * _round_up(2 * HW, 128) * 4                # pooled-feature scratch
        ca_sc = _round_up(C, 8) * 128 * 4
        return x_in + y_out + s_sc + ca_sc

    cap_bblk = max(1, min(B, 256))
    bblk_cands = sorted(set([d for d in range(1, cap_bblk + 1) if B % d == 0]
                            + list(range(8, cap_bblk + 1, 8))))
    Bblk = 1
    for c in bblk_cands:
        if act_bytes(c) + w_bytes > usable:
            continue
        if (_round_up(B, c) - B) * 8 > B:     # cap batch-padding waste at ~12.5%
            continue
        Bblk = max(Bblk, c)
    if _is_v7() and B > 1:
        # two TensorCores: keep at least two 'parallel' grid steps on the batch axis
        Bblk = min(Bblk, max(1, (B + 1) // 2))
    B_pad = _round_up(B, Bblk)
    nsteps = B_pad // Bblk
    # TODO(synk): for H*W so large that even Bblk=1 exceeds `usable`, tile the lane
    # (H*W) axis of the activations as well; not needed at the sizes exercised here.

    return dict(Bblk=Bblk, B_pad=B_pad, nsteps=nsteps, n_stripes=n_stripes, Hs=Hs,
                win_h=win_h, HsW=HsW, vmem_limit=vmem_limit)


# --------------------------- host-built spatial Toeplitz band -----------------------

def _build_spatial_band(w2, H, W, K, P, Hs, win_h):
    """Per-stripe Toeplitz band for the 'same' KxK conv of the two pooled maps.

    band[j, o*win_h*W + wy*W + wx, oy*W + ox] =
        w2[o, (start_j + wy) - (j*Hs + oy) + P, wx - ox + P]   (0 outside the kernel)
    so that  concat([max_window, mean_window], -1) @ band[j]  ==  conv2d output stripe j.
    """
    n_stripes = H // Hs
    wy = np.arange(win_h)[:, None, None, None]
    wx = np.arange(W)[None, :, None, None]
    oy = np.arange(Hs)[None, None, :, None]
    ox = np.arange(W)[None, None, None, :]
    kx = wx - ox + P
    kx_ok = (kx >= 0) & (kx < K)
    kx_c = np.clip(kx, 0, K - 1)
    mats, starts = [], []
    for j in range(n_stripes):
        start = int(np.clip(j * Hs - P, 0, H - win_h))
        starts.append(start)
        ky = (start + wy) - (j * Hs + oy) + P
        ok = kx_ok & (ky >= 0) & (ky < K)
        ky_c = np.clip(ky, 0, K - 1)
        streams = [np.where(ok, w2[o][ky_c, kx_c], 0.0).reshape(win_h * W, Hs * W)
                   for o in range(2)]
        mats.append(np.concatenate(streams, axis=0))
    band = np.stack(mats, axis=0)
    return (jnp.asarray(band, dtype=jnp.bfloat16),
            jnp.asarray(np.asarray(starts, dtype=np.int32)))


# --------------------------------- Pallas kernel ------------------------------------

def _make_kernel(C, W, HW, HsW, Bblk, win_h, n_stripes, k1):
    pad1 = k1 // 2
    KW = win_h * W            # input-window width (elements) of one pooled stream

    def kernel(x_ref, band_ref, w1_ref, starts_ref, bias_ref, o_ref, ca_sc, s_sc):
        j = pl.program_id(1)

        # ---- once per batch block: channel attention + channel-pooled maps ----
        @pl.when(j == 0)
        def _():
            xb = x_ref[...]                                   # (C, Bblk, HW) f32
            avg = jnp.mean(xb, axis=2)                        # (C, Bblk)  lane reduce
            mxp = jnp.max(xb, axis=2)
            pooled = jnp.concatenate([avg, mxp], axis=1)      # (C, 2*Bblk)
            # ECA 1-D conv over channels: k1 shifted FMAs (VPU), no dense band / MXU.
            if pad1 > 0:
                zpad = jnp.zeros((pad1, pooled.shape[1]), pooled.dtype)
                padded = jnp.concatenate([zpad, pooled, zpad], axis=0)
            else:
                padded = pooled
            pre = w1_ref[0] * padded[0:C, :]
            for t in range(1, k1):                            # static, k1 <= ~9
                pre = pre + w1_ref[t] * padded[t:t + C, :]
            sig = jax.nn.sigmoid(pre)
            ca = jax.nn.sigmoid(sig[:, :Bblk] + sig[:, Bblk:])    # (C, Bblk)
            ca_sc[...] = ca
            out1 = xb * ca[:, :, None]                        # (C, Bblk, HW)
            # channel max / mean over the leading C axis: elementwise VPU, no XLU.
            s_sc[:, 0:HW] = jnp.max(out1, axis=0)
            s_sc[:, HW:2 * HW] = jnp.mean(out1, axis=0)

        ca = ca_sc[...]                                       # (C, Bblk)

        # ---- spatial attention for this output stripe (one MXU matmul) ----
        if n_stripes == 1:
            s_win = s_sc[...]                                 # (Bblk, 2*HW)
            xs = x_ref[...]                                   # (C, Bblk, HW)
        else:
            off = starts_ref[j] * W                           # window start (elements)
            s_win = jnp.concatenate(
                [s_sc[:, pl.ds(off, KW)], s_sc[:, pl.ds(HW + off, KW)]], axis=1)
            col0 = pl.multiple_of(j * HsW, 128)
            xs = x_ref[:, :, pl.ds(col0, HsW)]                # (C, Bblk, HsW)
        # bf16 operands, f32 accumulation on the MXU (error well inside tolerance).
        sa_pre = jnp.dot(s_win.astype(band_ref.dtype), band_ref[0],
                         preferred_element_type=jnp.float32) + bias_ref[0]
        sa = jax.nn.sigmoid(sa_pre)                           # (Bblk, HsW)

        out1s = xs * ca[:, :, None]
        o_ref[...] = out1s * sa[None, :, :] + xs              # attentions + residual

    return kernel


def _build_call(B_pad, C, H, W, k1, plan, buffered_ok):
    HW = H * W
    Bblk, nsteps = plan["Bblk"], plan["nsteps"]
    n_stripes, HsW, win_h = plan["n_stripes"], plan["HsW"], plan["win_h"]
    KW2 = 2 * win_h * W

    kernel = _make_kernel(C, W, HW, HsW, Bblk, win_h, n_stripes, k1)

    # Constant-index band never changes block -> single-buffer it (saves a band-sized
    # VMEM buffer, which matters most on v7x's 64 MiB VMEM).
    band_kwargs = {}
    if n_stripes == 1 and buffered_ok:
        band_kwargs = dict(pipeline_mode=pl.Buffered(1))

    cost = pl.CostEstimate(
        flops=int(2 * B_pad * KW2 * HsW * n_stripes),
        transcendentals=int(B_pad * (HW + 4 * C)),
        bytes_accessed=int(2 * B_pad * C * HW * 4 + n_stripes * KW2 * HsW * 2),
    )

    return pl.pallas_call(
        kernel,
        out_shape=jax.ShapeDtypeStruct((C, B_pad, HW), jnp.float32),
        grid_spec=pltpu.PrefetchScalarGridSpec(
            num_scalar_prefetch=0,
            grid=(nsteps, n_stripes),
            in_specs=[
                pl.BlockSpec((C, Bblk, HW), lambda b, j: (0, b, 0)),    # activations
                pl.BlockSpec((1, KW2, HsW), lambda b, j: (j, 0, 0),     # Toeplitz band
                             **band_kwargs),
                pl.BlockSpec(memory_space=pltpu.SMEM),                  # ECA taps (k1,)
                pl.BlockSpec(memory_space=pltpu.SMEM),                  # stripe starts
                pl.BlockSpec(memory_space=pltpu.SMEM),                  # conv bias
            ],
            out_specs=pl.BlockSpec((C, Bblk, HsW), lambda b, j: (0, b, j)),
            scratch_shapes=[
                pltpu.VMEM((C, Bblk), jnp.float32),          # channel attention weights
                pltpu.VMEM((Bblk, 2 * HW), jnp.float32),     # [chan-max | chan-mean]
            ],
        ),
        compiler_params=pltpu.CompilerParams(
            dimension_semantics=("parallel", "arbitrary"),
            vmem_limit_bytes=int(plan["vmem_limit"]),
        ),
        cost_estimate=cost,
    )


# ------------------------------------ wrapper ---------------------------------------

def make_edam_block(w1d, w2d, b2d, kernel_size=49):
    """EDAMBlock forward with fixed weights.  Returns apply(x), x: (B, C, H, W) f32.

    w1d: (1, 1, k1) ECA Conv1d weight (no bias); w2d: (1, 2, K, K) spatial Conv2d
    weight; b2d: (1,) its bias.  Constants / pallas_call / jit are cached per shape.
    """
    k1 = int(w1d.shape[-1])
    K = int(kernel_size)
    P = K // 2
    w1_taps = jnp.asarray(np.asarray(w1d, dtype=np.float32).reshape(-1))
    bias = jnp.asarray(np.asarray(b2d, dtype=np.float32).reshape(1))
    w2_host = np.asarray(w2d, dtype=np.float32).reshape(2, K, K)
    buffered_ok = _buffered_supported()

    cache = {}

    def _compiled(shape):
        if shape not in cache:
            B, C, H, W = shape
            plan = _plan(B, C, H, W, K, buffered_ok)
            band, starts = _build_spatial_band(w2_host, H, W, K, P,
                                               plan["Hs"], plan["win_h"])
            call = _build_call(plan["B_pad"], C, H, W, k1, plan, buffered_ok)
            B_pad = plan["B_pad"]
            HW = H * W

            def run(x):
                # Host glue: NCHW -> (C, B, HW) so channels are the leading (un-tiled)
                # kernel axis; pad batch up to a whole number of batch blocks.
                x3 = jnp.transpose(x.reshape(B, C, HW), (1, 0, 2)).astype(jnp.float32)
                if B_pad != B:
                    x3 = jnp.pad(x3, ((0, 0), (0, B_pad - B), (0, 0)))
                y = call(x3, band, w1_taps, starts, bias)
                y = jnp.transpose(y, (1, 0, 2))[:B]
                return y.reshape(B, C, H, W)

            cache[shape] = jax.jit(run)
        return cache[shape]

    def apply(x):
        return _compiled(tuple(int(d) for d in x.shape))(x)

    return apply


# ------------------------------ pure-JAX reference ----------------------------------

def edam_block_reference(x, w1d, w2d, b2d, kernel_size=49):
    B, C, H, W = x.shape
    k1 = w1d.shape[-1]
    p1 = k1 // 2
    K = kernel_size
    P = K // 2

    avg = jnp.mean(x, axis=(2, 3))      # (B, C)
    mxp = jnp.max(x, axis=(2, 3))       # (B, C)

    def conv1d(v):                       # v: (B, C)
        out = jax.lax.conv_general_dilated(
            v[:, None, :], w1d, window_strides=(1,), padding=[(p1, p1)],
            dimension_numbers=("NCH", "OIH", "NCH"))
        return out[:, 0, :]

    ca = jax.nn.sigmoid(jax.nn.sigmoid(conv1d(avg)) + jax.nn.sigmoid(conv1d(mxp)))
    out1 = x * ca[:, :, None, None]

    smax = jnp.max(out1, axis=1, keepdims=True)
    smean = jnp.mean(out1, axis=1, keepdims=True)
    sin = jnp.concatenate([smax, smean], axis=1)        # (B, 2, H, W)
    sa = jax.lax.conv_general_dilated(
        sin, w2d, window_strides=(1, 1), padding=[(P, P), (P, P)],
        dimension_numbers=("NCHW", "OIHW", "NCHW")) + b2d.reshape(1, 1, 1, 1)
    sa = jax.nn.sigmoid(sa)
    return out1 * sa + x


# --------------------------------------- main ---------------------------------------

if __name__ == "__main__":
    B, C, H, W = 2, 4, 16, 16
    SPATIAL_K = 49                        # EDAMBlock default kernel_size=49
    k1 = adaptive_kernel_size(C)          # adaptive ECA kernel size (=3 for C=4)

    key = jax.random.PRNGKey(0)
    kx, kw1, kw2, kb = jax.random.split(key, 4)

    x = jax.random.normal(kx, (B, C, H, W), dtype=jnp.float32)
    w1d = jax.random.normal(kw1, (1, 1, k1), dtype=jnp.float32) * 0.5
    w2d = (jax.random.normal(kw2, (1, 2, SPATIAL_K, SPATIAL_K), dtype=jnp.float32)
           * (2.0 / (2 * SPATIAL_K * SPATIAL_K)) ** 0.5)
    b2d = jax.random.normal(kb, (1,), dtype=jnp.float32) * 0.1

    edam = make_edam_block(w1d, w2d, b2d, kernel_size=SPATIAL_K)
    out = jax.block_until_ready(edam(x))

    ref = jax.block_until_ready(
        edam_block_reference(x, w1d, w2d, b2d, kernel_size=SPATIAL_K))

    assert out.shape == (B, C, H, W)
    # Tolerance accounts for the bf16 spatial Toeplitz / pooled maps (f32 accumulation).
    err = float(jnp.max(jnp.abs(out - ref)))
    assert jnp.allclose(out, ref, atol=1e-2, rtol=1e-2), err

    print("KERNEL_OK")
</pallas_src>

<mosaic_0001>
module attributes {stable_mosaic.version = 11 : i64} {
  func.func @_copy(%arg0: i32, %arg1: memref<8x128xf32, #tpu.memory_space<vmem>>, %arg2: memref<8x128xf32, #tpu.memory_space<vmem>>) attributes {dimension_semantics = [#tpu.dimension_semantics<arbitrary>], iteration_bounds = array<i64: 1>, scalar_prefetch = 0 : i64, scratch_operands = 0 : i64, tpu.core_type = #tpu.core_type<tc>, window_params = [{pipeline_mode = #tpu.pipeline_mode<synchronous>, transform_indices = @transform_0, window_bounds = array<i64: 8, 128>}, {pipeline_mode = #tpu.pipeline_mode<synchronous>, transform_indices = @transform_1, window_bounds = array<i64: 8, 128>}]} {
    %c0 = arith.constant 0 : index
    %c0_0 = arith.constant 0 : index
    %0 = vector.load %arg1[%c0, %c0_0] : memref<8x128xf32, #tpu.memory_space<vmem>>, vector<8x128xf32>
    %c0_1 = arith.constant 0 : index
    %c0_2 = arith.constant 0 : index
    %1 = vector.load %arg2[%c0_1, %c0_2] : memref<8x128xf32, #tpu.memory_space<vmem>>, vector<8x128xf32>
    tpu.vector_store %arg2[%c0_1, %c0_2], %0 {strides = array<i32>} : memref<8x128xf32, #tpu.memory_space<vmem>>, vector<8x128xf32>,
    return
  }
  func.func @transform_0(%arg0: i32) -> (i32, i32) {
    %c0_i32 = arith.constant 0 : i32
    %c0_i32_0 = arith.constant 0 : i32
    %c0_i32_1 = arith.constant 0 : i32
    return %c0_i32, %c0_i32_0 : i32, i32
  }
  func.func @transform_1(%arg0: i32) -> (i32, i32) {
    %c0_i32 = arith.constant 0 : i32
    %c0_i32_0 = arith.constant 0 : i32
    %c0_i32_1 = arith.constant 0 : i32
    return %c0_i32, %c0_i32_0 : i32, i32
  }
}

module attributes {stable_mosaic.version = 11 : i64} {
  func.func @kernel(%arg0: i32, %arg1: i32, %arg2: memref<4x2x256xf32, #tpu.memory_space<vmem>>, %arg3: memref<1x512x256xbf16, #tpu.memory_space<vmem>>, %arg4: memref<3xf32, #tpu.memory_space<smem>>, %arg5: memref<1xi32, #tpu.memory_space<smem>>, %arg6: memref<1xf32, #tpu.memory_space<smem>>, %arg7: memref<4x2x256xf32, #tpu.memory_space<vmem>>, %arg8: memref<4x2xf32, #tpu.memory_space<vmem>>, %arg9: memref<2x512xf32, #tpu.memory_space<vmem>>) attributes {dimension_semantics = [#tpu.dimension_semantics<parallel>, #tpu.dimension_semantics<arbitrary>], iteration_bounds = array<i64: 1, 1>, scalar_prefetch = 0 : i64, scratch_operands = 2 : i64, tpu.core_type = #tpu.core_type<tc>, window_params = [{transform_indices = @transform_0, window_bounds = array<i64: 4, 2, 256>}, {transform_indices = @transform_1, window_bounds = array<i64: 1, 512, 256>}, {transform_indices = @transform_2, window_bounds = array<i64: 3>}, {transform_indices = @transform_3, window_bounds = array<i64: 1>}, {transform_indices = @transform_4, window_bounds = array<i64: 1>}, {transform_indices = @transform_5, window_bounds = array<i64: 4, 2, 256>}]} {
    %c0_i32 = arith.constant 0 : i32
    %0 = arith.cmpi eq, %arg1, %c0_i32 : i32
    %1 = arith.extui %0 : i1 to i32
    %c0_i32_0 = arith.constant 0 : i32
    %2 = arith.cmpi ne, %1, %c0_i32_0 : i32
    scf.if %2 {
      %c0_15 = arith.constant 0 : index
      %c0_16 = arith.constant 0 : index
      %c0_17 = arith.constant 0 : index
      %26 = vector.load %arg2[%c0_15, %c0_16, %c0_17] : memref<4x2x256xf32, #tpu.memory_space<vmem>>, vector<4x2x256xf32>
      %cst_18 = arith.constant dense<0.000000e+00> : vector<4x2xf32>
      %27 = vector.multi_reduction <add>, %26, %cst_18 [2] : vector<4x2x256xf32> to vector<4x2xf32>
      %cst_19 = arith.constant 2.560000e+02 : f32
      %28 = vector.broadcast %cst_19 : f32 to vector<4x2xf32>
      %29 = arith.divf %27, %28 : vector<4x2xf32>
      %cst_20 = arith.constant dense<0xFF800000> : vector<4x2xf32>
      %30 = vector.multi_reduction <maximumf>, %26, %cst_20 [2] : vector<4x2x256xf32> to vector<4x2xf32>
      %31 = tpu.concatenate %29, %30 in 1 : vector<4x2xf32>, vector<4x2xf32> -> vector<4x4xf32>
      %cst_21 = arith.constant 0.000000e+00 : f32
      %32 = vector.broadcast %cst_21 : f32 to vector<1x4xf32>
      %33 = tpu.concatenate %32, %31, %32 in 0 : vector<1x4xf32>, vector<4x4xf32>, vector<1x4xf32> -> vector<6x4xf32>
      %c0_22 = arith.constant 0 : index
      %34 = memref.load %arg4[%c0_22] : memref<3xf32, #tpu.memory_space<smem>>
      %35 = vector.extract_strided_slice %33 {offsets = [0, 0], sizes = [4, 4], strides = [1, 1]} : vector<6x4xf32> to vector<4x4xf32>
      %36 = vector.broadcast %34 : f32 to vector<4x4xf32>
      %37 = arith.mulf %36, %35 : vector<4x4xf32>
      %c1 = arith.constant 1 : index
      %38 = memref.load %arg4[%c1] : memref<3xf32, #tpu.memory_space<smem>>
      %39 = vector.extract_strided_slice %33 {offsets = [1, 0], sizes = [4, 4], strides = [1, 1]} : vector<6x4xf32> to vector<4x4xf32>
      %40 = vector.broadcast %38 : f32 to vector<4x4xf32>
      %41 = arith.mulf %40, %39 : vector<4x4xf32>
      %42 = arith.addf %37, %41 : vector<4x4xf32>
      %c2 = arith.constant 2 : index
      %43 = memref.load %arg4[%c2] : memref<3xf32, #tpu.memory_space<smem>>
      %44 = vector.extract_strided_slice %33 {offsets = [2, 0], sizes = [4, 4], strides = [1, 1]} : vector<6x4xf32> to vector<4x4xf32>
      %45 = vector.broadcast %43 : f32 to vector<4x4xf32>
      %46 = arith.mulf %45, %44 : vector<4x4xf32>
      %47 = arith.addf %42, %46 : vector<4x4xf32>
      %48 = arith.negf %47 : vector<4x4xf32>
      %49 = math.exp %48 : vector<4x4xf32>
      %cst_23 = arith.constant 1.000000e+00 : f32
      %50 = vector.broadcast %cst_23 : f32 to vector<4x4xf32>
      %51 = arith.addf %50, %49 : vector<4x4xf32>
      %52 = arith.divf %50, %51 : vector<4x4xf32>
      %53 = vector.extract_strided_slice %52 {offsets = [0, 0], sizes = [4, 2], strides = [1, 1]} : vector<4x4xf32> to vector<4x2xf32>
      %54 = vector.extract_strided_slice %52 {offsets = [0, 2], sizes = [4, 2], strides = [1, 1]} : vector<4x4xf32> to vector<4x2xf32>
      %55 = arith.addf %53, %54 : vector<4x2xf32>
      %56 = arith.negf %55 : vector<4x2xf32>
      %57 = math.exp %56 : vector<4x2xf32>
      %cst_24 = arith.constant 1.000000e+00 : f32
      %58 = vector.broadcast %cst_24 : f32 to vector<4x2xf32>
      %59 = arith.addf %58, %57 : vector<4x2xf32>
      %60 = arith.divf %58, %59 : vector<4x2xf32>
      %c0_25 = arith.constant 0 : index
      %c0_26 = arith.constant 0 : index
      %61 = vector.load %arg8[%c0_25, %c0_26] : memref<4x2xf32, #tpu.memory_space<vmem>>, vector<4x2xf32>
      tpu.vector_store %arg8[%c0_25, %c0_26], %60 {strides = array<i32>} : memref<4x2xf32, #tpu.memory_space<vmem>>, vector<4x2xf32>,
      %62 = vector.shape_cast %60 : vector<4x2xf32> to vector<4x2x1xf32>
      %63 = vector.broadcast %62 : vector<4x2x1xf32> to vector<4x2x256xf32>
      %64 = arith.mulf %26, %63 : vector<4x2x256xf32>
      %cst_27 = arith.constant dense<0xFF800000> : vector<2x256xf32>
      %65 = vector.multi_reduction <maximumf>, %64, %cst_27 [0] : vector<4x2x256xf32> to vector<2x256xf32>
      %c0_28 = arith.constant 0 : index
      %c0_29 = arith.constant 0 : index
      %66 = vector.load %arg9[%c0_28, %c0_29] : memref<2x512xf32, #tpu.memory_space<vmem>>, vector<2x256xf32>
      tpu.vector_store %arg9[%c0_28, %c0_29], %65 {strides = array<i32>} : memref<2x512xf32, #tpu.memory_space<vmem>>, vector<2x256xf32>,
      %cst_30 = arith.constant dense<0.000000e+00> : vector<2x256xf32>
      %67 = vector.multi_reduction <add>, %64, %cst_30 [0] : vector<4x2x256xf32> to vector<2x256xf32>
      %cst_31 = arith.constant 4.000000e+00 : f32
      %68 = vector.broadcast %cst_31 : f32 to vector<2x256xf32>
      %69 = arith.divf %67, %68 : vector<2x256xf32>
      %c0_32 = arith.constant 0 : index
      %c256 = arith.constant 256 : index
      %70 = vector.load %arg9[%c0_32, %c256] : memref<2x512xf32, #tpu.memory_space<vmem>>, vector<2x256xf32>
      tpu.vector_store %arg9[%c0_32, %c256], %69 {strides = array<i32>} : memref<2x512xf32, #tpu.memory_space<vmem>>, vector<2x256xf32>,
    } else {
    }
    %c0 = arith.constant 0 : index
    %c0_1 = arith.constant 0 : index
    %3 = vector.load %arg8[%c0, %c0_1] : memref<4x2xf32, #tpu.memory_space<vmem>>, vector<4x2xf32>
    %c0_2 = arith.constant 0 : index
    %c0_3 = arith.constant 0 : index
    %4 = vector.load %arg9[%c0_2, %c0_3] : memref<2x512xf32, #tpu.memory_space<vmem>>, vector<2x512xf32>
    %c0_4 = arith.constant 0 : index
    %c0_5 = arith.constant 0 : index
    %c0_6 = arith.constant 0 : index
    %5 = vector.load %arg2[%c0_4, %c0_5, %c0_6] : memref<4x2x256xf32, #tpu.memory_space<vmem>>, vector<4x2x256xf32>
    %6 = arith.truncf %4 : vector<2x512xf32> to vector<2x512xbf16>
    %c0_7 = arith.constant 0 : index
    %c0_8 = arith.constant 0 : index
    %c0_9 = arith.constant 0 : index
    %7 = vector.load %arg3[%c0_7, %c0_8, %c0_9] : memref<1x512x256xbf16, #tpu.memory_space<vmem>>, vector<1x512x256xbf16>
    %8 = vector.shape_cast %7 : vector<1x512x256xbf16> to vector<512x256xbf16>
    %cst = arith.constant dense<0.000000e+00> : vector<2x256xf32>
    %9 = tpu.matmul %6, %8, %cst {dimension_numbers = #tpu.dot_dimension_numbers<[1], [0], [0], [1], [0, 0, 1, 1], [], []>} : vector<2x512xbf16>, vector<512x256xbf16>, vector<2x256xf32> -> vector<2x256xf32>
    %c0_10 = arith.constant 0 : index
    %10 = memref.load %arg6[%c0_10] : memref<1xf32, #tpu.memory_space<smem>>
    %11 = vector.broadcast %10 : f32 to vector<2x256xf32>
    %12 = arith.addf %9, %11 : vector<2x256xf32>
    %13 = arith.negf %12 : vector<2x256xf32>
    %14 = math.exp %13 : vector<2x256xf32>
    %cst_11 = arith.constant 1.000000e+00 : f32
    %15 = vector.broadcast %cst_11 : f32 to vector<2x256xf32>
    %16 = arith.addf %15, %14 : vector<2x256xf32>
    %17 = arith.divf %15, %16 : vector<2x256xf32>
    %18 = vector.shape_cast %3 : vector<4x2xf32> to vector<4x2x1xf32>
    %19 = vector.broadcast %18 : vector<4x2x1xf32> to vector<4x2x256xf32>
    %20 = arith.mulf %5, %19 : vector<4x2x256xf32>
    %21 = vector.shape_cast %17 : vector<2x256xf32> to vector<1x2x256xf32>
    %22 = vector.broadcast %21 : vector<1x2x256xf32> to vector<4x2x256xf32>
    %23 = arith.mulf %20, %22 : vector<4x2x256xf32>
    %24 = arith.addf %23, %5 : vector<4x2x256xf32>
    %c0_12 = arith.constant 0 : index
    %c0_13 = arith.constant 0 : index
    %c0_14 = arith.constant 0 : index
    %25 = vector.load %arg7[%c0_12, %c0_13, %c0_14] : memref<4x2x256xf32, #tpu.memory_space<vmem>>, vector<4x2x256xf32>
    tpu.vector_store %arg7[%c0_12, %c0_13, %c0_14], %24 {strides = array<i32>} : memref<4x2x256xf32, #tpu.memory_space<vmem>>, vector<4x2x256xf32>,
    return
  }
  func.func @transform_0(%arg0: i32, %arg1: i32) -> (i32, i32, i32) {
    %c0_i32 = arith.constant 0 : i32
    %c0_i32_0 = arith.constant 0 : i32
    %c0_i32_1 = arith.constant 0 : i32
    return %c0_i32, %arg0, %c0_i32_0 : i32, i32, i32
  }
  func.func @transform_1(%arg0: i32, %arg1: i32) -> (i32, i32, i32) {
    %c0_i32 = arith.constant 0 : i32
    %c0_i32_0 = arith.constant 0 : i32
    %c0_i32_1 = arith.constant 0 : i32
    return %arg1, %c0_i32, %c0_i32_0 : i32, i32, i32
  }
  func.func @transform_2(%arg0: i32, %arg1: i32) -> i32 {
    %c0_i32 = arith.constant 0 : i32
    %c0_i32_0 = arith.constant 0 : i32
    return %c0_i32 : i32
  }
  func.func @transform_3(%arg0: i32, %arg1: i32) -> i32 {
    %c0_i32 = arith.constant 0 : i32
    %c0_i32_0 = arith.constant 0 : i32
    return %c0_i32 : i32
  }
  func.func @transform_4(%arg0: i32, %arg1: i32) -> i32 {
    %c0_i32 = arith.constant 0 : i32
    %c0_i32_0 = arith.constant 0 : i32
    return %c0_i32 : i32
  }
  func.func @transform_5(%arg0: i32, %arg1: i32) -> (i32, i32, i32) {
    %c0_i32 = arith.constant 0 : i32
    %c0_i32_0 = arith.constant 0 : i32
    return %c0_i32, %arg0, %arg1 : i32, i32, i32
  }
}

</mosaic_0001>

<llo_original>
// kernel: tpu_custom_call.1
$region0: #{tpu_custom_call.1}
  #allocation0 [shape = 'u32[]', space=smem, size = 0x4, offset = 0x4, fixed_abs, tag = 'smem constant byte address 0x4 - core index']
  #allocation1 [shape = 'u32[144,128]{1,0:T(1,128)}', space=vmem, size = 0x12000, scoped, tag = 'internal scratch']
  %s0 = inlined_call_operand.hbm [shape: f32[8,128], index: 0, kind: input, shape index: {}]
  %s1 = inlined_call_operand.hbm [shape: f32[8,128], index: 1, kind: output, shape index: {}]
  %s2 = sld [smem:[#allocation0]]
  $region18: #{tpu_custom_call.1} parent=0
    _
  %s4 = ssub.s32 1, %s2
  %s5 = scalar_select 0, %s4, %s2
  $region1: #{tpu_custom_call.1} parent=0
    #allocation2 [shape = 'u8[4096]{0}', space=vmem, size = 0x1000, scoped, tag = 'input window, operand 0, single buffered']
    #allocation3 [shape = 's32[1]{0}', space=sflag, size = 0x4, scoped, tag = 'scoped memory for tpu_custom_call.1']
    #allocation4 [shape = 's32[1]{0}', space=sflag, size = 0x4, scoped, tag = 'scoped memory for tpu_custom_call.1']
    #allocation5 [shape = 'u8[4096]{0}', space=vmem, size = 0x1000, scoped, tag = 'output window, operand 0, single buffered']
    %6 = vsyncpa [#allocation3], 0
    %7 = vsyncpa [#allocation4], 0
    // Predicated region
    $region2: #{tpu_custom_call.1} parent=1 // pred_check
      _
    $region3: #{tpu_custom_call.1} parent=1 // pred_check_branch
      %9 = sbr.rel (0) target = $region5
    $region4: #{tpu_custom_call.1} parent=1 // pred_region
      %s11 = ssub.s32 128, 128
      %12 = vsyncadd [#allocation3], %s11
      %s14 = sshll.u32 [#allocation2], 4
      %s15 = int_to_ptr.vmem [resolvable:$true] %s14
      %17 = dma.hbm_to_vmem [thread:$0]  %s0, 128, %s15, [#allocation3]
    $region5: #{tpu_custom_call.1} parent=1 // pred_fallthru
      _
    // Predicated region
    $region6: #{tpu_custom_call.1} parent=1 // pred_check
      _
    $region7: #{tpu_custom_call.1} parent=1 // pred_check_branch
      %19 = sbr.rel (0) target = $region9
    $region8: #{tpu_custom_call.1} parent=1 // pred_region
      %20 = dma.done [#allocation3], 128
    $region9: #{tpu_custom_call.1} parent=1 // pred_fallthru
      _
    %v21 = vld [vmem:[#allocation2] sm:$0xff]
    %22 = vst [vmem:[#allocation5] sm:$0xff] %v21
    // Predicated region
    $region10: #{tpu_custom_call.1} parent=1 // pred_check
      _
    $region11: #{tpu_custom_call.1} parent=1 // pred_check_branch
      %24 = sbr.rel (0) target = $region13
    $region12: #{tpu_custom_call.1} parent=1 // pred_region
      %s26 = ssub.s32 128, 128
      %27 = vsyncadd [#allocation4], %s26
      %s29 = sshll.u32 [#allocation5], 4
      %s30 = int_to_ptr.vmem [resolvable:$true] %s29
      %32 = dma.vmem_to_hbm [thread:$0]  %s30, 128, %s1, [#allocation4]
    $region13: #{tpu_custom_call.1} parent=1 // pred_fallthru
      _
    // Predicated region
    $region14: #{tpu_custom_call.1} parent=1 // pred_check
      _
    $region15: #{tpu_custom_call.1} parent=1 // pred_check_branch
      %34 = sbr.rel (0) target = $region17
    $region16: #{tpu_custom_call.1} parent=1 // pred_region
      %35 = dma.done [#allocation4], 128
    $region17: #{tpu_custom_call.1} parent=1 // pred_fallthru
      _
    %36 = vsyncpa [#allocation3], 1
    %37 = vsyncpa [#allocation4], 1

// kernel: run.1
$region0: #{run.1}
  #allocation0 [shape = 'u32[]', space=smem, size = 0x4, offset = 0x4, fixed_abs, tag = 'smem constant byte address 0x4 - core index']
  #allocation1 [shape = 'u32[144,128]{1,0:T(1,128)}', space=vmem, size = 0x12000, scoped, tag = 'internal scratch']
  #allocation2 [shape = 'f32[4,2]{1,0:T(4,128)}', space=vmem, size = 0x800, scoped, tag = 'scratch operand']
  #allocation3 [shape = 'f32[2,512]{1,0:T(2,128)}', space=vmem, size = 0x1000, scoped, tag = 'scratch operand']
  #allocation4 [shape = 's32[1]{0:T(128)S(6)}', space=smem, size = 0x200, scoped, tag = 'scoped memory for run.1']
  #allocation5 [shape = 'f32[1]{0:T(128)S(6)}', space=smem, size = 0x200, scoped, tag = 'scoped memory for run.1']
  %s0 = inlined_call_operand.vmem [shape: f32[4,2,256], index: 0, kind: input, shape index: {}]
  %s1 = inlined_call_operand.vmem [shape: bf16[1,512,256], index: 1, kind: input, shape index: {}]
  %s2 = inlined_call_operand.vmem [shape: f32[3], index: 2, kind: input, shape index: {}]
  %s3 = inlined_call_operand.<no memory space> [shape: s32[1], index: 3, kind: input, shape index: {}]
  %s4 = inlined_call_operand.<no memory space> [shape: f32[1], index: 4, kind: input, shape index: {}]
  %s5 = inlined_call_operand.vmem [shape: f32[4,2,256], index: 5, kind: output, shape index: {}]
  %s6 = sld [smem:[#allocation0]]
  $region38: #{run.1} parent=0
    _
  %s8 = ssub.s32 1, %s6
  %s9 = scalar_select 0, %s8, %s6
  %10 = sst [smem:[#allocation4]] %s3
  %11 = sst [smem:[#allocation5]] %s4
  $region1: #{run.1} parent=0
    #allocation6 [shape = 'u8[512]{0}', space=smem, size = 0x200, scoped, tag = 'input window, operand 2, single buffered']
    #allocation7 [shape = 's32[1]{0}', space=sflag, size = 0x4, scoped, tag = 'scoped memory for run.1']
    %12 = vsyncpa [#allocation7], 0
    // Predicated region
    $region2: #{run.1} parent=1 // pred_check
      _
    $region3: #{run.1} parent=1 // pred_check_branch
      %14 = sbr.rel (0) target = $region5
    $region4: #{run.1} parent=1 // pred_region
      _
    $region5: #{run.1} parent=1 // pred_fallthru
      _
    // Predicated region
    $region6: #{run.1} parent=1 // pred_check
      _
    $region7: #{run.1} parent=1 // pred_check_branch
      %16 = sbr.rel (0) target = $region9
    $region8: #{run.1} parent=1 // pred_region
      _
    $region9: #{run.1} parent=1 // pred_fallthru
      _
    // Predicated region
    $region10: #{run.1} parent=1 // pred_check
      _
    $region11: #{run.1} parent=1 // pred_check_branch
      %18 = sbr.rel (0) target = $region13
    $region12: #{run.1} parent=1 // pred_region
      %s20 = ssub.s32 16, 16
      %21 = vsyncadd [#allocation7], %s20
      %s23 = sshll.u32 %s2, 4
      %s24 = int_to_ptr.vmem [resolvable:$true] %s23
      %26 = dma.vmem_to_smem %s24, 16, [#allocation6], [#allocation7]
    $region13: #{run.1} parent=1 // pred_fallthru
      _
    // Predicated region
    $region14: #{run.1} parent=1 // pred_check
      _
    $region15: #{run.1} parent=1 // pred_check_branch
      %28 = sbr.rel (0) target = $region17
    $region16: #{run.1} parent=1 // pred_region
      _
    $region17: #{run.1} parent=1 // pred_fallthru
      _
    // Predicated region
    $region18: #{run.1} parent=1 // pred_check
      _
    $region19: #{run.1} parent=1 // pred_check_branch
      %30 = sbr.rel (0) target = $region21
    $region20: #{run.1} parent=1 // pred_region
      _
    $region21: #{run.1} parent=1 // pred_fallthru
      _
    // Predicated region
    $region22: #{run.1} parent=1 // pred_check
      _
    $region23: #{run.1} parent=1 // pred_check_branch
      %32 = sbr.rel (0) target = $region25
    $region24: #{run.1} parent=1 // pred_region
      %33 = dma.done [#allocation7], 16
    $region25: #{run.1} parent=1 // pred_fallthru
      _
    %34 = sfence
    %p35 = scmp.eq.s32.totalorder 0, 0
    // Predicated region
    $region26: #{run.1} parent=1 // pred_check
      %p36 = pneg %p35
    $region27: #{run.1} parent=1 // pred_check_branch
      %38 = sbr.rel (%p36) target = $region29
    $region28: #{run.1} parent=1 // pred_region
      %v39 = vld [vmem:[%s0] sm:$0xf]
      %v40 = vld [vmem:[%s0 + $0x4] sm:$0xf]
      %v41 = vld [vmem:[%s0 + $0x8] sm:$0xf]
      %v42 = vld [vmem:[%s0 + $0xc] sm:$0xf]
      %v48 = vunpack.c.l.s4 1983009808
      %v49 = vunpack.c.0.s8 %v48
      %v50 = vlaneseq
      %v51 = vshrl.u32 %v50, 7
      %v52 = vsub.s32 %v49, %v51
      %v53 = vrot.slane %v39, %v52
      %v54 = vcombine.high %v53, %v53
      %v56 = vunpack.c.l.s4 1983009808
      %v57 = vunpack.c.0.s8 %v56
      %v58 = vlaneseq
      %v59 = vshrl.u32 %v58, 7
      %v60 = vsub.s32 %v57, %v59
      %v61 = vrot.slane %v40, %v60
      %v62 = vcombine.high %v61, %v61
      %v64 = vunpack.c.l.s4 1983009808
      %v65 = vunpack.c.0.s8 %v64
      %v66 = vlaneseq
      %v67 = vshrl.u32 %v66, 7
      %v68 = vsub.s32 %v65, %v67
      %v69 = vrot.slane %v41, %v68
      %v70 = vcombine.high %v69, %v69
      %v72 = vunpack.c.l.s4 1983009808
      %v73 = vunpack.c.0.s8 %v72
      %v74 = vlaneseq
      %v75 = vshrl.u32 %v74, 7
      %v76 = vsub.s32 %v73, %v75
      %v77 = vrot.slane %v42, %v76
      %v78 = vcombine.high %v77, %v77
      %vm87 = vcmask 1041408
      %v88 = vsel %vm87, %v53, 0.0
      %v89 = vsel %vm87, %v54, 0.0
      %v90 = vadd.f32 %v88, %v89
      %91 = vadd.xlane.f32.xlu0 %v90
      %v92 = vpop.xlane.xlu0 %91
      %v93 = vsel %vm87, %v61, 0.0
      %v94 = vsel %vm87, %v62, 0.0
      %v95 = vadd.f32 %v93, %v94
      %96 = vadd.xlane.f32.xlu0 %v95
      %v97 = vpop.xlane.xlu0 %96
      %v98 = vsel %vm87, %v69, 0.0
      %v99 = vsel %vm87, %v70, 0.0
      %v100 = vadd.f32 %v98, %v99
      %101 = vadd.xlane.f32.xlu0 %v100
      %v102 = vpop.xlane.xlu0 %101
      %v103 = vsel %vm87, %v77, 0.0
      %v104 = vsel %vm87, %v78, 0.0
      %v105 = vadd.f32 %v103, %v104
      %106 = vadd.xlane.f32.xlu0 %v105
      %v107 = vpop.xlane.xlu0 %106
      %v108 = vrcp.pop 256.0
      %v109 = vmul.f32 %v92, %v108
      %v110 = vmul.f32 %v97, %v108
      %v111 = vmul.f32 %v102, %v108
      %v112 = vmul.f32 %v107, %v108
      %v113 = vsel %vm87, %v53, -inf
      %v114 = vsel %vm87, %v54, -inf
      %v115 = vmax.f32 %v113, %v114
      %116 = vmax.xlane.f32.xlu0 %v115
      %v117 = vpop.xlane.xlu0 %116
      %v118 = vsel %vm87, %v61, -inf
      %v119 = vsel %vm87, %v62, -inf
      %v120 = vmax.f32 %v118, %v119
      %121 = vmax.xlane.f32.xlu0 %v120
      %v122 = vpop.xlane.xlu0 %121
      %v123 = vsel %vm87, %v69, -inf
      %v124 = vsel %vm87, %v70, -inf
      %v125 = vmax.f32 %v123, %v124
      %126 = vmax.xlane.f32.xlu0 %v125
      %v127 = vpop.xlane.xlu0 %126
      %v128 = vsel %vm87, %v77, -inf
      %v129 = vsel %vm87, %v78, -inf
      %v130 = vmax.f32 %v128, %v129
      %131 = vmax.xlane.f32.xlu0 %v130
      %v132 = vpop.xlane.xlu0 %131
      %v137 = vlaneseq
      %v138 = vand.u32 %v137, 127
      %v139 = vlaneseq
      %v140 = vshrl.u32 %v139, 7
      %v141 = vsub.s32 %v138, %v140
      %v142 = vrot.slane %v109, %v141
      %v143 = vlaneseq
      %v144 = vshrl.u32 %v143, 7
      %v145 = vsub.s32 %v138, %v144
      %v146 = vrot.slane %v110, %v145
      %v147 = vlaneseq
      %v148 = vshrl.u32 %v147, 7
      %v149 = vsub.s32 %v138, %v148
      %v150 = vrot.slane %v111, %v149
      %v151 = vlaneseq
      %v152 = vshrl.u32 %v151, 7
      %v153 = vsub.s32 %v138, %v152
      %v154 = vrot.slane %v112, %v153
      %vm155 = vcmask 1041409
      %v156 = vsel %vm155, %v146, %v142
      %vm157 = vcmask 1042434
      %v158 = vsel %vm157, %v150, %v156
      %vm159 = vcmask 1043459
      %v160 = vsel %vm159, %v154, %v158
      %v166 = vadd.s32 %v138, 4294967294
      %v167 = vlaneseq
      %v168 = vshrl.u32 %v167, 7
      %v169 = vsub.s32 %v166, %v168
      %v170 = vrot.slane %v117, %v169
      %v171 = vlaneseq
      %v172 = vshrl.u32 %v171, 7
      %v173 = vsub.s32 %v166, %v172
      %v174 = vrot.slane %v122, %v173
      %v175 = vlaneseq
      %v176 = vshrl.u32 %v175, 7
      %v177 = vsub.s32 %v166, %v176
      %v178 = vrot.slane %v127, %v177
      %v179 = vlaneseq
      %v180 = vshrl.u32 %v179, 7
      %v181 = vsub.s32 %v166, %v180
      %v182 = vrot.slane %v132, %v181
      %v183 = vsel %vm155, %v174, %v170
      %v184 = vsel %vm157, %v178, %v183
      %v185 = vsel %vm159, %v182, %v184
      %vm187 = vcmask 15360
      %v188 = vsel %vm187, %v160, %v185
      %v190 = vrot.slane %v188, 7
      %vm192 = vcmask 1040384
      %v193 = vsel %vm192, 0.0, %v190
      %vm194 = vcmask 1044480
      %v195 = vsel %vm194, %v193, 0.0
      %s196 = sld [smem:[#allocation6]]
      %v197 = vstv %s196
      %v198 = vmul.f32 %v197, %v195
      %s199 = sld [smem:[#allocation6 + $0x1]]
      %v200 = vstv %s199
      %v201 = vmul.f32 %v200, %v195
      %v203 = vrot.slane %v201, 1
      %v205 = vadd.f32 %v198, %v203
      %s206 = sld [smem:[#allocation6 + $0x2]]
      %v207 = vstv %s206
      %v208 = vmul.f32 %v207, %v195
      %v210 = vrot.slane %v208, 2
      %v212 = vadd.f32 %v205, %v210
      %v213 = vxor.u32 %v212, 2147483648
      %v214 = vmul.f32 %v213, 1.442695
      %v215 = vpow.pop %v214
      %v216 = vadd.f32 %v215, 1.0
      %v217 = vrcp.pop %v216
      %v218 = vmul.f32 1.0, %v217
      %220 = vrot.lane.b32.xlu0 %v218, 126
      %v221 = vpop.permute.xlu0 %220
      %v223 = vadd.f32 %v218, %v221
      %v224 = vxor.u32 %v223, 2147483648
      %v225 = vmul.f32 %v224, 1.442695
      %v226 = vpow.pop %v225
      %v227 = vadd.f32 %v226, 1.0
      %v228 = vrcp.pop %v227
      %v229 = vmul.f32 1.0, %v228
      %vm230 = vcmask 11264
      %231 = vst.msk [vmem:[#allocation2] sm:$0xf] %vm230, %v229
      %v232 = vlaneseq
      %v233 = vshrl.u32 %v232, 7
      %v234 = vsub.s32 0, %v233
      %v235 = vrot.slane %v229, %v234
      %237 = vbcast.lane.b32.xlu0 %v235, 256
      %v238 = vpop.permute.xlu0 %237
      %v239 = vlaneseq
      %v240 = vshrl.u32 %v239, 7
      %v241 = vsub.s32 1, %v240
      %v242 = vrot.slane %v229, %v241
      %244 = vbcast.lane.b32.xlu0 %v242, 256
      %v245 = vpop.permute.xlu0 %244
      %v246 = vlaneseq
      %v247 = vshrl.u32 %v246, 7
      %v248 = vsub.s32 2, %v247
      %v249 = vrot.slane %v229, %v248
      %251 = vbcast.lane.b32.xlu0 %v249, 256
      %v252 = vpop.permute.xlu0 %251
      %v253 = vlaneseq
      %v254 = vshrl.u32 %v253, 7
      %v255 = vsub.s32 3, %v254
      %v256 = vrot.slane %v229, %v255
      %258 = vbcast.lane.b32.xlu0 %v256, 256
      %v259 = vpop.permute.xlu0 %258
      %v265 = vunpack.c.l.s4 269488144
      %v266 = vunpack.c.0.s8 %v265
      %v267 = vlaneseq
      %v268 = vshrl.u32 %v267, 7
      %v269 = vsub.s32 %v266, %v268
      %v270 = vrot.slane %v238, %v269
      %v272 = vunpack.c.l.s4 269488144
      %v273 = vunpack.c.0.s8 %v272
      %v274 = vlaneseq
      %v275 = vshrl.u32 %v274, 7
      %v276 = vsub.s32 %v273, %v275
      %v277 = vrot.slane %v245, %v276
      %v279 = vunpack.c.l.s4 269488144
      %v280 = vunpack.c.0.s8 %v279
      %v281 = vlaneseq
      %v282 = vshrl.u32 %v281, 7
      %v283 = vsub.s32 %v280, %v282
      %v284 = vrot.slane %v252, %v283
      %v286 = vunpack.c.l.s4 269488144
      %v287 = vunpack.c.0.s8 %v286
      %v288 = vlaneseq
      %v289 = vshrl.u32 %v288, 7
      %v290 = vsub.s32 %v287, %v289
      %v291 = vrot.slane %v259, %v290
      %v296 = vmul.f32 %v39, %v270
      %v297 = vmul.f32 %v40, %v277
      %v298 = vmul.f32 %v41, %v284
      %v299 = vmul.f32 %v42, %v291
      %vm300 = vcmask 1043458
      %vm301 = vmor %vm300, %vm87
      %v302 = vsel %vm301, %v296, -inf
      %v303 = vsel %vm301, %v297, -inf
      %v304 = vsel %vm301, %v298, -inf
      %v305 = vsel %vm301, %v299, -inf
      %v306 = vmax.f32 %v302, %v303
      %v307 = vmax.f32 %v304, %v305
      %v308 = vmax.f32 %v306, %v307
      %309 = vst [vmem:[#allocation3] sm:$0xf] %v308
      %v315 = vunpack.c.l.s4 1983009808
      %v316 = vunpack.c.0.s8 %v315
      %v317 = vlaneseq
      %v318 = vshrl.u32 %v317, 7
      %v319 = vsub.s32 %v316, %v318
      %v320 = vrot.slane %v296, %v319
      %v321 = vcombine.high %v320, %v320
      %v323 = vunpack.c.l.s4 1983009808
      %v324 = vunpack.c.0.s8 %v323
      %v325 = vlaneseq
      %v326 = vshrl.u32 %v325, 7
      %v327 = vsub.s32 %v324, %v326
      %v328 = vrot.slane %v297, %v327
      %v329 = vcombine.high %v328, %v328
      %v331 = vunpack.c.l.s4 1983009808
      %v332 = vunpack.c.0.s8 %v331
      %v333 = vlaneseq
      %v334 = vshrl.u32 %v333, 7
      %v335 = vsub.s32 %v332, %v334
      %v336 = vrot.slane %v298, %v335
      %v337 = vcombine.high %v336, %v336
      %v339 = vunpack.c.l.s4 1983009808
      %v340 = vunpack.c.0.s8 %v339
      %v341 = vlaneseq
      %v342 = vshrl.u32 %v341, 7
      %v343 = vsub.s32 %v340, %v342
      %v344 = vrot.slane %v299, %v343
      %v345 = vcombine.high %v344, %v344
      %v354 = vsel %vm87, %v320, 0.0
      %v355 = vsel %vm87, %v328, 0.0
      %v356 = vadd.f32 %v354, %v355
      %v357 = vsel %vm87, %v336, 0.0
      %v358 = vadd.f32 %v356, %v357
      %v359 = vsel %vm87, %v344, 0.0
      %v360 = vadd.f32 %v358, %v359
      %v361 = vsel %vm87, %v321, 0.0
      %v362 = vsel %vm87, %v329, 0.0
      %v363 = vadd.f32 %v361, %v362
      %v364 = vsel %vm87, %v337, 0.0
      %v365 = vadd.f32 %v363, %v364
      %v366 = vsel %vm87, %v345, 0.0
      %v367 = vadd.f32 %v365, %v366
      %v368 = vrcp.pop 4.0
      %v369 = vmul.f32 %v360, %v368
      %v370 = vmul.f32 %v367, %v368
      %v373 = vcombine.low %v369, %v370
      %v375 = vunpack.c.l.s4 1983009808
      %v376 = vunpack.c.0.s8 %v375
      %v377 = vlaneseq
      %v378 = vshrl.u32 %v377, 7
      %v379 = vsub.s32 %v376, %v378
      %v380 = vrot.slane %v373, %v379
      %382 = vst [vmem:[#allocation3 + $0x4] sm:$0xf] %v380
    $region29: #{run.1} parent=1 // pred_fallthru
      _
    %v383 = vld [vmem:[#allocation2] sm:$0xf]
    %v384 = vld [vmem:[#allocation3] sm:$0xff]
    %v385 = vld [vmem:[%s0] sm:$0xf]
    %v386 = vld [vmem:[%s0 + $0x4] sm:$0xf]
    %v387 = vld [vmem:[%s0 + $0x8] sm:$0xf]
    %v388 = vld [vmem:[%s0 + $0xc] sm:$0xf]
    %v390 = vcombine.high %v384, %v384
    %v392 = vunpack.c.l.s4 1983009808
    %v393 = vunpack.c.0.s8 %v392
    %v394 = vlaneseq
    %v395 = vshrl.u32 %v394, 7
    %v396 = vsub.s32 %v393, %v395
    %v397 = vrot.slane %v384, %v396
    %v399 = vunpack.c.l.s4 1983009808
    %v400 = vunpack.c.0.s8 %v399
    %v401 = vlaneseq
    %v402 = vshrl.u32 %v401, 7
    %v403 = vsub.s32 %v400, %v402
    %v404 = vrot.slane %v390, %v403
    %v405 = vcombine.high %v397, %v397
    %v406 = vcombine.high %v404, %v404
    %v411 = vpack.c.bf16 %v397, %v397
    %v412 = vpack.c.bf16 %v405, %v405
    %v413 = vpack.c.bf16 %v404, %v404
    %v414 = vpack.c.bf16 %v406, %v406
    %v415 = vld [vmem:[%s1] sm:$0xff]
    %v416 = vld [vmem:[%s1 + $0x8] sm:$0xff]
    %v417 = vld [vmem:[%s1 + $0x10] sm:$0xff]
    %v418 = vld [vmem:[%s1 + $0x18] sm:$0xff]
    %v419 = vld [vmem:[%s1 + $0x20] sm:$0xff]
    %v420 = vld [vmem:[%s1 + $0x28] sm:$0xff]
    %v421 = vld [vmem:[%s1 + $0x30] sm:$0xff]
    %v422 = vld [vmem:[%s1 + $0x38] sm:$0xff]
    %v423 = vld [vmem:[%s1 + $0x40] sm:$0xff]
    %v424 = vld [vmem:[%s1 + $0x48] sm:$0xff]
    %v425 = vld [vmem:[%s1 + $0x50] sm:$0xff]
    %v426 = vld [vmem:[%s1 + $0x58] sm:$0xff]
    %v427 = vld [vmem:[%s1 + $0x60] sm:$0xff]
    %v428 = vld [vmem:[%s1 + $0x68] sm:$0xff]
    %v429 = vld [vmem:[%s1 + $0x70] sm:$0xff]
    %v430 = vld [vmem:[%s1 + $0x78] sm:$0xff]
    %v431 = vld [vmem:[%s1 + $0x80] sm:$0xff]
    %v432 = vld [vmem:[%s1 + $0x88] sm:$0xff]
    %v433 = vld [vmem:[%s1 + $0x90] sm:$0xff]
    %v434 = vld [vmem:[%s1 + $0x98] sm:$0xff]
    %v435 = vld [vmem:[%s1 + $0xa0] sm:$0xff]
    %v436 = vld [vmem:[%s1 + $0xa8] sm:$0xff]
    %v437 = vld [vmem:[%s1 + $0xb0] sm:$0xff]
    %v438 = vld [vmem:[%s1 + $0xb8] sm:$0xff]
    %v439 = vld [vmem:[%s1 + $0xc0] sm:$0xff]
    %v440 = vld [vmem:[%s1 + $0xc8] sm:$0xff]
    %v441 = vld [vmem:[%s1 + $0xd0] sm:$0xff]
    %v442 = vld [vmem:[%s1 + $0xd8] sm:$0xff]
    %v443 = vld [vmem:[%s1 + $0xe0] sm:$0xff]
    %v444 = vld [vmem:[%s1 + $0xe8] sm:$0xff]
    %v445 = vld [vmem:[%s1 + $0xf0] sm:$0xff]
    %v446 = vld [vmem:[%s1 + $0xf8] sm:$0xff]
    %v447 = vld [vmem:[%s1 + $0x100] sm:$0xff]
    %v448 = vld [vmem:[%s1 + $0x108] sm:$0xff]
    %v449 = vld [vmem:[%s1 + $0x110] sm:$0xff]
    %v450 = vld [vmem:[%s1 + $0x118] sm:$0xff]
    %v451 = vld [vmem:[%s1 + $0x120] sm:$0xff]
    %v452 = vld [vmem:[%s1 + $0x128] sm:$0xff]
    %v453 = vld [vmem:[%s1 + $0x130] sm:$0xff]
    %v454 = vld [vmem:[%s1 + $0x138] sm:$0xff]
    %v455 = vld [vmem:[%s1 + $0x140] sm:$0xff]
    %v456 = vld [vmem:[%s1 + $0x148] sm:$0xff]
    %v457 = vld [vmem:[%s1 + $0x150] sm:$0xff]
    %v458 = vld [vmem:[%s1 + $0x158] sm:$0xff]
    %v459 = vld [vmem:[%s1 + $0x160] sm:$0xff]
    %v460 = vld [vmem:[%s1 + $0x168] sm:$0xff]
    %v461 = vld [vmem:[%s1 + $0x170] sm:$0xff]
    %v462 = vld [vmem:[%s1 + $0x178] sm:$0xff]
    %v463 = vld [vmem:[%s1 + $0x180] sm:$0xff]
    %v464 = vld [vmem:[%s1 + $0x188] sm:$0xff]
    %v465 = vld [vmem:[%s1 + $0x190] sm:$0xff]
    %v466 = vld [vmem:[%s1 + $0x198] sm:$0xff]
    %v467 = vld [vmem:[%s1 + $0x1a0] sm:$0xff]
    %v468 = vld [vmem:[%s1 + $0x1a8] sm:$0xff]
    %v469 = vld [vmem:[%s1 + $0x1b0] sm:$0xff]
    %v470 = vld [vmem:[%s1 + $0x1b8] sm:$0xff]
    %v471 = vld [vmem:[%s1 + $0x1c0] sm:$0xff]
    %v472 = vld [vmem:[%s1 + $0x1c8] sm:$0xff]
    %v473 = vld [vmem:[%s1 + $0x1d0] sm:$0xff]
    %v474 = vld [vmem:[%s1 + $0x1d8] sm:$0xff]
    %v475 = vld [vmem:[%s1 + $0x1e0] sm:$0xff]
    %v476 = vld [vmem:[%s1 + $0x1e8] sm:$0xff]
    %v477 = vld [vmem:[%s1 + $0x1f0] sm:$0xff]
    %v478 = vld [vmem:[%s1 + $0x1f8] sm:$0xff]
    %s479 = sld [smem:[#allocation5]]
    %v480 = vstv %s479
    %v545 = vunpack.c.l.b16 %v415
    %v546 = vunpack.c.h.b16 %v415
    %v547 = vunpack.c.l.b16 %v416
    %v548 = vunpack.c.h.b16 %v416
    %v549 = vunpack.c.l.b16 %v417
    %v550 = vunpack.c.h.b16 %v417
    %v551 = vunpack.c.l.b16 %v418
    %v552 = vunpack.c.h.b16 %v418
    %v553 = vunpack.c.l.b16 %v419
    %v554 = vunpack.c.h.b16 %v419
    %v555 = vunpack.c.l.b16 %v420
    %v556 = vunpack.c.h.b16 %v420
    %v557 = vunpack.c.l.b16 %v421
    %v558 = vunpack.c.h.b16 %v421
    %v559 = vunpack.c.l.b16 %v422
    %v560 = vunpack.c.h.b16 %v422
    %v561 = vunpack.c.l.b16 %v423
    %v562 = vunpack.c.h.b16 %v423
    %v563 = vunpack.c.l.b16 %v424
    %v564 = vunpack.c.h.b16 %v424
    %v565 = vunpack.c.l.b16 %v425
    %v566 = vunpack.c.h.b16 %v425
    %v567 = vunpack.c.l.b16 %v426
    %v568 = vunpack.c.h.b16 %v426
    %v569 = vunpack.c.l.b16 %v427
    %v570 = vunpack.c.h.b16 %v427
    %v571 = vunpack.c.l.b16 %v428
    %v572 = vunpack.c.h.b16 %v428
    %v573 = vunpack.c.l.b16 %v429
    %v574 = vunpack.c.h.b16 %v429
    %v575 = vunpack.c.l.b16 %v430
    %v576 = vunpack.c.h.b16 %v430
    %v577 = vunpack.c.l.b16 %v431
    %v578 = vunpack.c.h.b16 %v431
    %v579 = vunpack.c.l.b16 %v432
    %v580 = vunpack.c.h.b16 %v432
    %v581 = vunpack.c.l.b16 %v433
    %v582 = vunpack.c.h.b16 %v433
    %v583 = vunpack.c.l.b16 %v434
    %v584 = vunpack.c.h.b16 %v434
    %v585 = vunpack.c.l.b16 %v435
    %v586 = vunpack.c.h.b16 %v435
    %v587 = vunpack.c.l.b16 %v436
    %v588 = vunpack.c.h.b16 %v436
    %v589 = vunpack.c.l.b16 %v437
    %v590 = vunpack.c.h.b16 %v437
    %v591 = vunpack.c.l.b16 %v438
    %v592 = vunpack.c.h.b16 %v438
    %v593 = vunpack.c.l.b16 %v439
    %v594 = vunpack.c.h.b16 %v439
    %v595 = vunpack.c.l.b16 %v440
    %v596 = vunpack.c.h.b16 %v440
    %v597 = vunpack.c.l.b16 %v441
    %v598 = vunpack.c.h.b16 %v441
    %v599 = vunpack.c.l.b16 %v442
    %v600 = vunpack.c.h.b16 %v442
    %v601 = vunpack.c.l.b16 %v443
    %v602 = vunpack.c.h.b16 %v443
    %v603 = vunpack.c.l.b16 %v444
    %v604 = vunpack.c.h.b16 %v444
    %v605 = vunpack.c.l.b16 %v445
    %v606 = vunpack.c.h.b16 %v445
    %v607 = vunpack.c.l.b16 %v446
    %v608 = vunpack.c.h.b16 %v446
    %v609 = vunpack.c.l.b16 %v447
    %v610 = vunpack.c.h.b16 %v447
    %v611 = vunpack.c.l.b16 %v448
    %v612 = vunpack.c.h.b16 %v448
    %v613 = vunpack.c.l.b16 %v449
    %v614 = vunpack.c.h.b16 %v449
    %v615 = vunpack.c.l.b16 %v450
    %v616 = vunpack.c.h.b16 %v450
    %v617 = vunpack.c.l.b16 %v451
    %v618 = vunpack.c.h.b16 %v451
    %v619 = vunpack.c.l.b16 %v452
    %v620 = vunpack.c.h.b16 %v452
    %v621 = vunpack.c.l.b16 %v453
    %v622 = vunpack.c.h.b16 %v453
    %v623 = vunpack.c.l.b16 %v454
    %v624 = vunpack.c.h.b16 %v454
    %v625 = vunpack.c.l.b16 %v455
    %v626 = vunpack.c.h.b16 %v455
    %v627 = vunpack.c.l.b16 %v456
    %v628 = vunpack.c.h.b16 %v456
    %v629 = vunpack.c.l.b16 %v457
    %v630 = vunpack.c.h.b16 %v457
    %v631 = vunpack.c.l.b16 %v458
    %v632 = vunpack.c.h.b16 %v458
    %v633 = vunpack.c.l.b16 %v459
    %v634 = vunpack.c.h.b16 %v459
    %v635 = vunpack.c.l.b16 %v460
    %v636 = vunpack.c.h.b16 %v460
    %v637 = vunpack.c.l.b16 %v461
    %v638 = vunpack.c.h.b16 %v461
    %v639 = vunpack.c.l.b16 %v462
    %v640 = vunpack.c.h.b16 %v462
    %v641 = vunpack.c.l.b16 %v463
    %v642 = vunpack.c.h.b16 %v463
    %v643 = vunpack.c.l.b16 %v464
    %v644 = vunpack.c.h.b16 %v464
    %v645 = vunpack.c.l.b16 %v465
    %v646 = vunpack.c.h.b16 %v465
    %v647 = vunpack.c.l.b16 %v466
    %v648 = vunpack.c.h.b16 %v466
    %v649 = vunpack.c.l.b16 %v467
    %v650 = vunpack.c.h.b16 %v467
    %v651 = vunpack.c.l.b16 %v468
    %v652 = vunpack.c.h.b16 %v468
    %v653 = vunpack.c.l.b16 %v469
    %v654 = vunpack.c.h.b16 %v469
    %v655 = vunpack.c.l.b16 %v470
    %v656 = vunpack.c.h.b16 %v470
    %v657 = vunpack.c.l.b16 %v471
    %v658 = vunpack.c.h.b16 %v471
    %v659 = vunpack.c.l.b16 %v472
    %v660 = vunpack.c.h.b16 %v472
    %v661 = vunpack.c.l.b16 %v473
    %v662 = vunpack.c.h.b16 %v473
    %v663 = vunpack.c.l.b16 %v474
    %v664 = vunpack.c.h.b16 %v474
    %v665 = vunpack.c.l.b16 %v475
    %v666 = vunpack.c.h.b16 %v475
    %v667 = vunpack.c.l.b16 %v476
    %v668 = vunpack.c.h.b16 %v476
    %v669 = vunpack.c.l.b16 %v477
    %v670 = vunpack.c.h.b16 %v477
    %v671 = vunpack.c.l.b16 %v478
    %v672 = vunpack.c.h.b16 %v478
    %v673 = vpack.c.b16 %v547, %v545
    %v674 = vpack.c.b16 %v548, %v546
    %v675 = vpack.c.b16 %v551, %v549
    %v676 = vpack.c.b16 %v552, %v550
    %v677 = vpack.c.b16 %v555, %v553
    %v678 = vpack.c.b16 %v556, %v554
    %v679 = vpack.c.b16 %v559, %v557
    %v680 = vpack.c.b16 %v560, %v558
    %v681 = vpack.c.b16 %v563, %v561
    %v682 = vpack.c.b16 %v564, %v562
    %v683 = vpack.c.b16 %v567, %v565
    %v684 = vpack.c.b16 %v568, %v566
    %v685 = vpack.c.b16 %v571, %v569
    %v686 = vpack.c.b16 %v572, %v570
    %v687 = vpack.c.b16 %v575, %v573
    %v688 = vpack.c.b16 %v576, %v574
    %v689 = vpack.c.b16 %v579, %v577
    %v690 = vpack.c.b16 %v580, %v578
    %v691 = vpack.c.b16 %v583, %v581
    %v692 = vpack.c.b16 %v584, %v582
    %v693 = vpack.c.b16 %v587, %v585
    %v694 = vpack.c.b16 %v588, %v586
    %v695 = vpack.c.b16 %v591, %v589
    %v696 = vpack.c.b16 %v592, %v590
    %v697 = vpack.c.b16 %v595, %v593
    %v698 = vpack.c.b16 %v596, %v594
    %v699 = vpack.c.b16 %v599, %v597
    %v700 = vpack.c.b16 %v600, %v598
    %v701 = vpack.c.b16 %v603, %v601
    %v702 = vpack.c.b16 %v604, %v602
    %v703 = vpack.c.b16 %v607, %v605
    %v704 = vpack.c.b16 %v608, %v606
    %v705 = vpack.c.b16 %v611, %v609
    %v706 = vpack.c.b16 %v612, %v610
    %v707 = vpack.c.b16 %v615, %v613
    %v708 = vpack.c.b16 %v616, %v614
    %v709 = vpack.c.b16 %v619, %v617
    %v710 = vpack.c.b16 %v620, %v618
    %v711 = vpack.c.b16 %v623, %v621
    %v712 = vpack.c.b16 %v624, %v622
    %v713 = vpack.c.b16 %v627, %v625
    %v714 = vpack.c.b16 %v628, %v626
    %v715 = vpack.c.b16 %v631, %v629
    %v716 = vpack.c.b16 %v632, %v630
    %v717 = vpack.c.b16 %v635, %v633
    %v718 = vpack.c.b16 %v636, %v634
    %v719 = vpack.c.b16 %v639, %v637
    %v720 = vpack.c.b16 %v640, %v638
    %v721 = vpack.c.b16 %v643, %v641
    %v722 = vpack.c.b16 %v644, %v642
    %v723 = vpack.c.b16 %v647, %v645
    %v724 = vpack.c.b16 %v648, %v646
    %v725 = vpack.c.b16 %v651, %v649
    %v726 = vpack.c.b16 %v652, %v650
    %v727 = vpack.c.b16 %v655, %v653
    %v728 = vpack.c.b16 %v656, %v654
    %v729 = vpack.c.b16 %v659, %v657
    %v730 = vpack.c.b16 %v660, %v658
    %v731 = vpack.c.b16 %v663, %v661
    %v732 = vpack.c.b16 %v664, %v662
    %v733 = vpack.c.b16 %v667, %v665
    %v734 = vpack.c.b16 %v668, %v666
    %v735 = vpack.c.b16 %v671, %v669
    %v736 = vpack.c.b16 %v672, %v670
    %801 = vmatprep.subr.bf16.mxu0 %v674
    %802 = vmatpush1.bf16.msra.mxu0 %v673
    %803 = vmatprep.subr.bf16.mxu0 %v676
    %804 = vmatpush1.bf16.msra.mxu0 %v675
    %805 = vmatprep.subr.bf16.mxu0 %v678
    %806 = vmatpush1.bf16.msra.mxu0 %v677
    %807 = vmatprep.subr.bf16.mxu0 %v680
    %808 = vmatpush1.bf16.msra.mxu0 %v679
    %809 = vmatprep.subr.bf16.mxu0 %v682
    %810 = vmatpush1.bf16.msra.mxu0 %v681
    %811 = vmatprep.subr.bf16.mxu0 %v684
    %812 = vmatpush1.bf16.msra.mxu0 %v683
    %813 = vmatprep.subr.bf16.mxu0 %v686
    %814 = vmatpush1.bf16.msra.mxu0 %v685
    %815 = vmatprep.subr.bf16.mxu0 %v688
    %816 = vmatpush1.bf16.msra.mxu0 %v687
    %817 = vmatprep.subr.bf16.mxu0 %v690
    %818 = vmatpush1.bf16.msra.mxu0 %v689
    %819 = vmatprep.subr.bf16.mxu0 %v692
    %820 = vmatpush1.bf16.msra.mxu0 %v691
    %821 = vmatprep.subr.bf16.mxu0 %v694
    %822 = vmatpush1.bf16.msra.mxu0 %v693
    %823 = vmatprep.subr.bf16.mxu0 %v696
    %824 = vmatpush1.bf16.msra.mxu0 %v695
    %825 = vmatprep.subr.bf16.mxu0 %v698
    %826 = vmatpush1.bf16.msra.mxu0 %v697
    %827 = vmatprep.subr.bf16.mxu0 %v700
    %828 = vmatpush1.bf16.msra.mxu0 %v699
    %829 = vmatprep.subr.bf16.mxu0 %v702
    %830 = vmatpush1.bf16.msra.mxu0 %v701
    %831 = vmatprep.subr.bf16.mxu0 %v704
    %832 = vmatpush1.bf16.msra.mxu0 %v703
    %833 = vmatprep.mubr.bf16.mxu0 %v412
    %834 = vmatmul.mubr.bf16.gmra.mrb[0].mxu0 %v411
    %v835 = vpop.f32.mrb[0].mxu0
    %v836 = vadd.f32 %v480, %v835
    %v837 = vpop.f32.mrb[0].mxu0
    %v838 = vadd.f32 %v480, %v837
    %v839 = vpop.f32.mrb[0].mxu0
    %v840 = vpop.f32.mrb[0].mxu0
    %841 = vdwg.mxu0
    %842 = vmatprep.subr.bf16.mxu0 %v706
    %843 = vmatpush1.bf16.msra.mxu0 %v705
    %844 = vmatprep.subr.bf16.mxu0 %v708
    %845 = vmatpush1.bf16.msra.mxu0 %v707
    %846 = vmatprep.subr.bf16.mxu0 %v710
    %847 = vmatpush1.bf16.msra.mxu0 %v709
    %848 = vmatprep.subr.bf16.mxu0 %v712
    %849 = vmatpush1.bf16.msra.mxu0 %v711
    %850 = vmatprep.subr.bf16.mxu0 %v714
    %851 = vmatpush1.bf16.msra.mxu0 %v713
    %852 = vmatprep.subr.bf16.mxu0 %v716
    %853 = vmatpush1.bf16.msra.mxu0 %v715
    %854 = vmatprep.subr.bf16.mxu0 %v718
    %855 = vmatpush1.bf16.msra.mxu0 %v717
    %856 = vmatprep.subr.bf16.mxu0 %v720
    %857 = vmatpush1.bf16.msra.mxu0 %v719
    %858 = vmatprep.subr.bf16.mxu0 %v722
    %859 = vmatpush1.bf16.msra.mxu0 %v721
    %860 = vmatprep.subr.bf16.mxu0 %v724
    %861 = vmatpush1.bf16.msra.mxu0 %v723
    %862 = vmatprep.subr.bf16.mxu0 %v726
    %863 = vmatpush1.bf16.msra.mxu0 %v725
    %864 = vmatprep.subr.bf16.mxu0 %v728
    %865 = vmatpush1.bf16.msra.mxu0 %v727
    %866 = vmatprep.subr.bf16.mxu0 %v730
    %867 = vmatpush1.bf16.msra.mxu0 %v729
    %868 = vmatprep.subr.bf16.mxu0 %v732
    %869 = vmatpush1.bf16.msra.mxu0 %v731
    %870 = vmatprep.subr.bf16.mxu0 %v734
    %871 = vmatpush1.bf16.msra.mxu0 %v733
    %872 = vmatprep.subr.bf16.mxu0 %v736
    %873 = vmatpush1.bf16.msra.mxu0 %v735
    %874 = vmatprep.mubr.bf16.mxu0 %v414
    %875 = vmatmul.mubr.bf16.gmra.mrb[0].mxu0 %v413
    %v876 = vpop.f32.mrb[0].mxu0
    %v877 = vadd.f32 %v836, %v876
    %v878 = vpop.f32.mrb[0].mxu0
    %v879 = vadd.f32 %v838, %v878
    %v880 = vpop.f32.mrb[0].mxu0
    %v881 = vpop.f32.mrb[0].mxu0
    %882 = vdwg.mxu0
    %v883 = vxor.u32 %v877, 2147483648
    %v884 = vxor.u32 %v879, 2147483648
    %v885 = vmul.f32 %v883, 1.442695
    %v886 = vpow.pop %v885
    %v887 = vmul.f32 %v884, 1.442695
    %v888 = vpow.pop %v887
    %v889 = vadd.f32 %v886, 1.0
    %v890 = vadd.f32 %v888, 1.0
    %v891 = vrcp.pop %v889
    %v892 = vmul.f32 1.0, %v891
    %v893 = vrcp.pop %v890
    %v894 = vmul.f32 1.0, %v893
    %v895 = vlaneseq
    %v896 = vshrl.u32 %v895, 7
    %v897 = vsub.s32 0, %v896
    %v898 = vrot.slane %v383, %v897
    %900 = vbcast.lane.b32.xlu0 %v898, 256
    %v901 = vpop.permute.xlu0 %900
    %v902 = vlaneseq
    %v903 = vshrl.u32 %v902, 7
    %v904 = vsub.s32 1, %v903
    %v905 = vrot.slane %v383, %v904
    %907 = vbcast.lane.b32.xlu0 %v905, 256
    %v908 = vpop.permute.xlu0 %907
    %v909 = vlaneseq
    %v910 = vshrl.u32 %v909, 7
    %v911 = vsub.s32 2, %v910
    %v912 = vrot.slane %v383, %v911
    %914 = vbcast.lane.b32.xlu0 %v912, 256
    %v915 = vpop.permute.xlu0 %914
    %v916 = vlaneseq
    %v917 = vshrl.u32 %v916, 7
    %v918 = vsub.s32 3, %v917
    %v919 = vrot.slane %v383, %v918
    %921 = vbcast.lane.b32.xlu0 %v919, 256
    %v922 = vpop.permute.xlu0 %921
    %v928 = vunpack.c.l.s4 269488144
    %v929 = vunpack.c.0.s8 %v928
    %v930 = vlaneseq
    %v931 = vshrl.u32 %v930, 7
    %v932 = vsub.s32 %v929, %v931
    %v933 = vrot.slane %v901, %v932
    %v935 = vunpack.c.l.s4 269488144
    %v936 = vunpack.c.0.s8 %v935
    %v937 = vlaneseq
    %v938 = vshrl.u32 %v937, 7
    %v939 = vsub.s32 %v936, %v938
    %v940 = vrot.slane %v908, %v939
    %v942 = vunpack.c.l.s4 269488144
    %v943 = vunpack.c.0.s8 %v942
    %v944 = vlaneseq
    %v945 = vshrl.u32 %v944, 7
    %v946 = vsub.s32 %v943, %v945
    %v947 = vrot.slane %v915, %v946
    %v949 = vunpack.c.l.s4 269488144
    %v950 = vunpack.c.0.s8 %v949
    %v951 = vlaneseq
    %v952 = vshrl.u32 %v951, 7
    %v953 = vsub.s32 %v950, %v952
    %v954 = vrot.slane %v922, %v953
    %v959 = vmul.f32 %v385, %v933
    %v960 = vmul.f32 %v386, %v940
    %v961 = vmul.f32 %v387, %v947
    %v962 = vmul.f32 %v388, %v954
    %v965 = vcombine.low %v892, %v894
    %v967 = vunpack.c.l.s4 1983009808
    %v968 = vunpack.c.0.s8 %v967
    %v969 = vlaneseq
    %v970 = vshrl.u32 %v969, 7
    %v971 = vsub.s32 %v968, %v970
    %v972 = vrot.slane %v965, %v971
    %v974 = vmul.f32 %v959, %v972
    %v975 = vmul.f32 %v960, %v972
    %v976 = vmul.f32 %v961, %v972
    %v977 = vmul.f32 %v962, %v972
    %v978 = vadd.f32 %v974, %v385
    %v979 = vadd.f32 %v975, %v386
    %v980 = vadd.f32 %v976, %v387
    %v981 = vadd.f32 %v977, %v388
    %982 = vst [vmem:[%s5] sm:$0xf] %v978
    %983 = vst [vmem:[%s5 + $0x4] sm:$0xf] %v979
    %984 = vst [vmem:[%s5 + $0x8] sm:$0xf] %v980
    %985 = vst [vmem:[%s5 + $0xc] sm:$0xf] %v981
    // Predicated region
    $region30: #{run.1} parent=1 // pred_check
      _
    $region31: #{run.1} parent=1 // pred_check_branch
      %987 = sbr.rel (0) target = $region33
    $region32: #{run.1} parent=1 // pred_region
      _
    $region33: #{run.1} parent=1 // pred_fallthru
      _
    // Predicated region
    $region34: #{run.1} parent=1 // pred_check
      _
    $region35: #{run.1} parent=1 // pred_check_branch
      %989 = sbr.rel (0) target = $region37
    $region36: #{run.1} parent=1 // pred_region
      _
    $region37: #{run.1} parent=1 // pred_fallthru
      _
    %990 = vsyncpa [#allocation7], 1

</llo_original>
